<compile_context>
chip_gen: v7x
topology: tpu7x:2x2x1
jax: 0.10.0
libtpu: 0.0.40
codegen_flags: <defaults>
</compile_context>

<pallas_src>
import jax
import jax.numpy as jnp
from jax.experimental import pallas as pl
from jax.experimental.pallas import tpu as pltpu

_LANE = 128       # feature dims padded to a multiple of the lane width
_SUBLANE = 16     # batch tile multiple (bf16 packs 16 rows per vreg)
_MAX_TB = 1024    # max batch-tile rows: amortizes per-step overhead, tiny VMEM


def _round_up(v, m):
    return ((v + m - 1) // m) * m


def qnet_kernel(x_ref, w1_ref, w2_ref, w3_ref, b3_ref, o_ref):
    # Layer 1: Linear(N_states -> hidden, bias=False) + ReLU.
    # bf16 operands on the MXU, fp32 accumulation, fp32 elementwise.
    h1 = jnp.dot(x_ref[...], w1_ref[...], preferred_element_type=jnp.float32)
    h1 = jnp.maximum(h1, 0.0)
    # Layer 2: Linear(hidden -> hidden, bias=False) + ReLU.
    h2 = jnp.dot(h1.astype(jnp.bfloat16), w2_ref[...],
                 preferred_element_type=jnp.float32)
    h2 = jnp.maximum(h2, 0.0)
    # Layer 3: Linear(hidden -> N_actions, bias=True); bias add in fp32.
    out = jnp.dot(h2.astype(jnp.bfloat16), w3_ref[...],
                  preferred_element_type=jnp.float32)
    o_ref[...] = (out + b3_ref[...]).astype(o_ref.dtype)


def init_params(key, n_states, n_actions, hidden):
    """nn.Linear-style init (uniform +-1/sqrt(fan_in)); weights stored [in, out]."""
    k1, k2, k3, k4 = jax.random.split(key, 4)

    def u(k, shape, fan_in):
        bound = 1.0 / jnp.sqrt(jnp.float32(fan_in))
        return jax.random.uniform(k, shape, jnp.float32, -bound, bound)

    w1 = u(k1, (n_states, hidden), n_states)
    w2 = u(k2, (hidden, hidden), hidden)
    w3 = u(k3, (hidden, n_actions), hidden)
    b3 = u(k4, (1, n_actions), hidden)
    return w1, w2, w3, b3


def prepare_params(w1, w2, w3, b3):
    """One-time zero-padding of feature dims to multiples of 128 (lane-dense
    matmuls and unmasked output stores) + cast of matmul weights to bf16.
    Padded rows/cols are zero, so the math is unchanged; the wrapper slices
    the output back to the logical [B, N_actions]."""
    n_states, hidden = w1.shape
    n_actions = w3.shape[1]
    ns_p = _round_up(n_states, _LANE)
    h_p = _round_up(hidden, _LANE)
    a_p = _round_up(n_actions, _LANE)

    def pad2(a, r, c, dtype):
        out = jnp.zeros((r, c), dtype)
        return out.at[: a.shape[0], : a.shape[1]].set(a.astype(dtype))

    w1p = pad2(w1, ns_p, h_p, jnp.bfloat16)
    w2p = pad2(w2, h_p, h_p, jnp.bfloat16)
    w3p = pad2(w3, h_p, a_p, jnp.bfloat16)
    b3p = pad2(b3, 1, a_p, jnp.float32)   # bias-add stays fp32
    return (w1p, w2p, w3p, b3p, n_states, n_actions)


def qnetwork_forward(x, params):
    """x: [B, N_states] float32. Returns [B, N_actions] float32."""
    w1p, w2p, w3p, b3p, n_states, n_actions = params
    B = x.shape[0]
    ns_p, h_p = w1p.shape
    a_p = w3p.shape[1]

    # Batch tile: multiple of 16 sublanes (bf16-friendly); pad B so the grid
    # divides evenly.  Ragged remainders are handled by zero-padding + final
    # slicing, never by sub-(8,128) blocks or masked stores.
    tb = min(_MAX_TB, _round_up(max(B, 1), _SUBLANE))
    b_p = _round_up(B, tb)
    grid = (b_p // tb,)

    # Streaming operand in bf16 (halves HBM->VMEM traffic); zero-padded.
    x_p = jnp.zeros((b_p, ns_p), jnp.bfloat16).at[:B, :n_states].set(
        x.astype(jnp.bfloat16))

    # VMEM budget: resident weights + double-buffered x/out tiles + fp32
    # intermediates; capped at 64 MiB so the same tiling is safe on v7x.
    weight_bytes = w1p.size * 2 + w2p.size * 2 + w3p.size * 2 + b3p.size * 4
    stream_bytes = 2 * (tb * ns_p * 2 + tb * a_p * 4)
    interm_bytes = tb * (2 * h_p + a_p) * 4
    vmem_limit = int(min(64 * 1024 * 1024,
                         max(32 * 1024 * 1024,
                             weight_bytes + stream_bytes + interm_bytes + (8 << 20))))

    cost = pl.CostEstimate(
        flops=2 * b_p * (ns_p * h_p + h_p * h_p + h_p * a_p),
        transcendentals=0,
        bytes_accessed=int(x_p.size * 2 + weight_bytes + b_p * a_p * 4),
    )

    out_p = pl.pallas_call(
        qnet_kernel,
        out_shape=jax.ShapeDtypeStruct((b_p, a_p), jnp.float32),
        grid=grid,
        in_specs=[
            pl.BlockSpec((tb, ns_p), lambda i: (i, 0)),    # x: streamed per tile
            pl.BlockSpec((ns_p, h_p), lambda i: (0, 0)),   # w1: VMEM-resident
            pl.BlockSpec((h_p, h_p), lambda i: (0, 0)),    # w2: VMEM-resident
            pl.BlockSpec((h_p, a_p), lambda i: (0, 0)),    # w3: VMEM-resident
            pl.BlockSpec((1, a_p), lambda i: (0, 0)),      # b3: VMEM-resident
        ],
        out_specs=pl.BlockSpec((tb, a_p), lambda i: (i, 0)),
        compiler_params=pltpu.CompilerParams(
            dimension_semantics=("parallel",),
            vmem_limit_bytes=vmem_limit,
        ),
        cost_estimate=cost,
    )(x_p, w1p, w2p, w3p, b3p)

    return out_p[:B, :n_actions]


if __name__ == "__main__":
    key = jax.random.PRNGKey(0)
    kx, kp = jax.random.split(key)

    B, N_states, N_actions, hidden = 8, 4, 3, 10
    x = jax.random.normal(kx, (B, N_states), jnp.float32)
    w1, w2, w3, b3 = init_params(kp, N_states, N_actions, hidden)
    params = prepare_params(w1, w2, w3, b3)

    out = qnetwork_forward(x, params)
    jax.block_until_ready(out)
    assert out.shape == (B, N_actions)

    # Reference with identical numerics (bf16 MXU inputs, fp32 accumulation).
    bf = jnp.bfloat16
    h = jnp.maximum(jnp.dot(x.astype(bf), w1.astype(bf),
                            preferred_element_type=jnp.float32), 0.0)
    h = jnp.maximum(jnp.dot(h.astype(bf), w2.astype(bf),
                            preferred_element_type=jnp.float32), 0.0)
    ref = jnp.dot(h.astype(bf), w3.astype(bf),
                  preferred_element_type=jnp.float32) + b3
    assert jnp.allclose(out, ref, atol=1e-3, rtol=1e-3)

    # Looser sanity check vs. plain fp32 math (the PyTorch-equivalent forward).
    ref32 = jnp.maximum(x @ w1, 0.0)
    ref32 = jnp.maximum(ref32 @ w2, 0.0)
    ref32 = ref32 @ w3 + b3
    assert jnp.allclose(out, ref32, atol=5e-2, rtol=5e-2)

    print("KERNEL_OK")
</pallas_src>

<mosaic_0001>
module attributes {stable_mosaic.version = 11 : i64} {
  func.func @qnet_kernel(%arg0: i32, %arg1: memref<16x128xbf16, #tpu.memory_space<vmem>>, %arg2: memref<128x128xbf16, #tpu.memory_space<vmem>>, %arg3: memref<128x128xbf16, #tpu.memory_space<vmem>>, %arg4: memref<128x128xbf16, #tpu.memory_space<vmem>>, %arg5: memref<1x128xf32, #tpu.memory_space<vmem>>, %arg6: memref<16x128xf32, #tpu.memory_space<vmem>>) attributes {dimension_semantics = [#tpu.dimension_semantics<parallel>], iteration_bounds = array<i64: 1>, scalar_prefetch = 0 : i64, scratch_operands = 0 : i64, tpu.core_type = #tpu.core_type<tc>, window_params = [{transform_indices = @transform_0, window_bounds = array<i64: 16, 128>}, {pipeline_mode = #tpu.pipeline_mode<synchronous>, transform_indices = @transform_1, window_bounds = array<i64: 128, 128>}, {pipeline_mode = #tpu.pipeline_mode<synchronous>, transform_indices = @transform_2, window_bounds = array<i64: 128, 128>}, {pipeline_mode = #tpu.pipeline_mode<synchronous>, transform_indices = @transform_3, window_bounds = array<i64: 128, 128>}, {pipeline_mode = #tpu.pipeline_mode<synchronous>, transform_indices = @transform_4, window_bounds = array<i64: 1, 128>}, {transform_indices = @transform_5, window_bounds = array<i64: 16, 128>}]} {
    %c0 = arith.constant 0 : index
    %c0_0 = arith.constant 0 : index
    %0 = vector.load %arg1[%c0, %c0_0] : memref<16x128xbf16, #tpu.memory_space<vmem>>, vector<16x128xbf16>
    %c0_1 = arith.constant 0 : index
    %c0_2 = arith.constant 0 : index
    %1 = vector.load %arg2[%c0_1, %c0_2] : memref<128x128xbf16, #tpu.memory_space<vmem>>, vector<128x128xbf16>
    %cst = arith.constant dense<0.000000e+00> : vector<16x128xf32>
    %2 = tpu.matmul %0, %1, %cst {dimension_numbers = #tpu.dot_dimension_numbers<[1], [0], [0], [1], [0, 0, 1, 1], [], []>} : vector<16x128xbf16>, vector<128x128xbf16>, vector<16x128xf32> -> vector<16x128xf32>
    %cst_3 = arith.constant 0.000000e+00 : f32
    %3 = vector.broadcast %cst_3 : f32 to vector<16x128xf32>
    %4 = arith.maximumf %2, %3 : vector<16x128xf32>
    %5 = arith.truncf %4 : vector<16x128xf32> to vector<16x128xbf16>
    %c0_4 = arith.constant 0 : index
    %c0_5 = arith.constant 0 : index
    %6 = vector.load %arg3[%c0_4, %c0_5] : memref<128x128xbf16, #tpu.memory_space<vmem>>, vector<128x128xbf16>
    %cst_6 = arith.constant dense<0.000000e+00> : vector<16x128xf32>
    %7 = tpu.matmul %5, %6, %cst_6 {dimension_numbers = #tpu.dot_dimension_numbers<[1], [0], [0], [1], [0, 0, 1, 1], [], []>} : vector<16x128xbf16>, vector<128x128xbf16>, vector<16x128xf32> -> vector<16x128xf32>
    %cst_7 = arith.constant 0.000000e+00 : f32
    %8 = vector.broadcast %cst_7 : f32 to vector<16x128xf32>
    %9 = arith.maximumf %7, %8 : vector<16x128xf32>
    %10 = arith.truncf %9 : vector<16x128xf32> to vector<16x128xbf16>
    %c0_8 = arith.constant 0 : index
    %c0_9 = arith.constant 0 : index
    %11 = vector.load %arg4[%c0_8, %c0_9] : memref<128x128xbf16, #tpu.memory_space<vmem>>, vector<128x128xbf16>
    %cst_10 = arith.constant dense<0.000000e+00> : vector<16x128xf32>
    %12 = tpu.matmul %10, %11, %cst_10 {dimension_numbers = #tpu.dot_dimension_numbers<[1], [0], [0], [1], [0, 0, 1, 1], [], []>} : vector<16x128xbf16>, vector<128x128xbf16>, vector<16x128xf32> -> vector<16x128xf32>
    %c0_11 = arith.constant 0 : index
    %c0_12 = arith.constant 0 : index
    %13 = vector.load %arg5[%c0_11, %c0_12] : memref<1x128xf32, #tpu.memory_space<vmem>>, vector<1x128xf32>
    %14 = vector.broadcast %13 : vector<1x128xf32> to vector<16x128xf32>
    %15 = arith.addf %12, %14 : vector<16x128xf32>
    %c0_13 = arith.constant 0 : index
    %c0_14 = arith.constant 0 : index
    %16 = vector.load %arg6[%c0_13, %c0_14] : memref<16x128xf32, #tpu.memory_space<vmem>>, vector<16x128xf32>
    tpu.vector_store %arg6[%c0_13, %c0_14], %15 {strides = array<i32>} : memref<16x128xf32, #tpu.memory_space<vmem>>, vector<16x128xf32>,
    return
  }
  func.func @transform_0(%arg0: i32) -> (i32, i32) {
    %c0_i32 = arith.constant 0 : i32
    %c0_i32_0 = arith.constant 0 : i32
    return %arg0, %c0_i32 : i32, i32
  }
  func.func @transform_1(%arg0: i32) -> (i32, i32) {
    %c0_i32 = arith.constant 0 : i32
    %c0_i32_0 = arith.constant 0 : i32
    %c0_i32_1 = arith.constant 0 : i32
    return %c0_i32, %c0_i32_0 : i32, i32
  }
  func.func @transform_2(%arg0: i32) -> (i32, i32) {
    %c0_i32 = arith.constant 0 : i32
    %c0_i32_0 = arith.constant 0 : i32
    %c0_i32_1 = arith.constant 0 : i32
    return %c0_i32, %c0_i32_0 : i32, i32
  }
  func.func @transform_3(%arg0: i32) -> (i32, i32) {
    %c0_i32 = arith.constant 0 : i32
    %c0_i32_0 = arith.constant 0 : i32
    %c0_i32_1 = arith.constant 0 : i32
    return %c0_i32, %c0_i32_0 : i32, i32
  }
  func.func @transform_4(%arg0: i32) -> (i32, i32) {
    %c0_i32 = arith.constant 0 : i32
    %c0_i32_0 = arith.constant 0 : i32
    %c0_i32_1 = arith.constant 0 : i32
    return %c0_i32, %c0_i32_0 : i32, i32
  }
  func.func @transform_5(%arg0: i32) -> (i32, i32) {
    %c0_i32 = arith.constant 0 : i32
    %c0_i32_0 = arith.constant 0 : i32
    return %arg0, %c0_i32 : i32, i32
  }
}

</mosaic_0001>

<llo_original>
// kernel: tpu_custom_call.1
$region0: #{tpu_custom_call.1}
  #allocation0 [shape = 'u32[]', space=smem, size = 0x4, offset = 0x4, fixed_abs, tag = 'smem constant byte address 0x4 - core index']
  #allocation1 [shape = 'u32[144,128]{1,0:T(1,128)}', space=vmem, size = 0x12000, scoped, tag = 'internal scratch']
  %s0 = inlined_call_operand.hbm [shape: bf16[16,128], index: 0, kind: input, shape index: {}]
  %s1 = inlined_call_operand.hbm [shape: bf16[128,128], index: 1, kind: input, shape index: {}]
  %s2 = inlined_call_operand.hbm [shape: bf16[128,128], index: 2, kind: input, shape index: {}]
  %s3 = inlined_call_operand.hbm [shape: bf16[128,128], index: 3, kind: input, shape index: {}]
  %s4 = inlined_call_operand.vmem [shape: f32[1,128], index: 4, kind: input, shape index: {}]
  %s5 = inlined_call_operand.hbm [shape: f32[16,128], index: 5, kind: output, shape index: {}]
  %s6 = sld [smem:[#allocation0]]
  $region46: #{tpu_custom_call.1} parent=0
    _
  %s8 = ssub.s32 1, %s6
  %s9 = scalar_select 0, %s8, %s6
  $region1: #{tpu_custom_call.1} parent=0
    #allocation2 [shape = 'u8[4096]{0}', space=vmem, size = 0x1000, scoped, tag = 'input window, operand 0, single buffered']
    #allocation3 [shape = 's32[1]{0}', space=sflag, size = 0x4, scoped, tag = 'scoped memory for tpu_custom_call.1']
    #allocation4 [shape = 's32[1]{0}', space=sflag, size = 0x4, scoped, tag = 'scoped memory for tpu_custom_call.1']
    #allocation5 [shape = 'u8[32768]{0}', space=vmem, size = 0x8000, scoped, tag = 'input window, operand 1, single buffered']
    #allocation6 [shape = 's32[1]{0}', space=sflag, size = 0x4, scoped, tag = 'scoped memory for tpu_custom_call.1']
    #allocation7 [shape = 'u8[32768]{0}', space=vmem, size = 0x8000, scoped, tag = 'input window, operand 2, single buffered']
    #allocation8 [shape = 'u8[32768]{0}', space=vmem, size = 0x8000, scoped, tag = 'input window, operand 3, single buffered']
    #allocation9 [shape = 's32[1]{0}', space=sflag, size = 0x4, scoped, tag = 'scoped memory for tpu_custom_call.1']
    #allocation10 [shape = 'u8[8192]{0}', space=vmem, size = 0x2000, scoped, tag = 'output window, operand 0, single buffered']
    %10 = vsyncpa [#allocation3], 0
    %11 = vsyncpa [#allocation6], 0
    %12 = vsyncpa [#allocation9], 0
    %13 = vsyncpa [#allocation4], 0
    // Predicated region
    $region2: #{tpu_custom_call.1} parent=1 // pred_check
      _
    $region3: #{tpu_custom_call.1} parent=1 // pred_check_branch
      %15 = sbr.rel (0) target = $region5
    $region4: #{tpu_custom_call.1} parent=1 // pred_region
      %s17 = ssub.s32 128, 128
      %18 = vsyncadd [#allocation3], %s17
      %s19 = sshll.u32 [#allocation2], 4
      %s20 = int_to_ptr.vmem [resolvable:$true] %s19
      %25 = dma.hbm_to_vmem [thread:$0]  %s0, 128, %s20, [#allocation3], 64, 64, 4
    $region5: #{tpu_custom_call.1} parent=1 // pred_fallthru
      _
    // Predicated region
    $region6: #{tpu_custom_call.1} parent=1 // pred_check
      _
    $region7: #{tpu_custom_call.1} parent=1 // pred_check_branch
      %27 = sbr.rel (0) target = $region9
    $region8: #{tpu_custom_call.1} parent=1 // pred_region
      %s29 = ssub.s32 1024, 1024
      %30 = vsyncadd [#allocation6], %s29
      %s31 = sshll.u32 [#allocation5], 4
      %s32 = int_to_ptr.vmem [resolvable:$true] %s31
      %37 = dma.hbm_to_vmem [thread:$0]  %s1, 1024, %s32, [#allocation6], 64, 64, 4
    $region9: #{tpu_custom_call.1} parent=1 // pred_fallthru
      _
    // Predicated region
    $region10: #{tpu_custom_call.1} parent=1 // pred_check
      _
    $region11: #{tpu_custom_call.1} parent=1 // pred_check_branch
      %39 = sbr.rel (0) target = $region13
    $region12: #{tpu_custom_call.1} parent=1 // pred_region
      %s41 = ssub.s32 1024, 1024
      %42 = vsyncadd [#allocation6], %s41
      %s43 = sshll.u32 [#allocation7], 4
      %s44 = int_to_ptr.vmem [resolvable:$true] %s43
      %49 = dma.hbm_to_vmem [thread:$0]  %s2, 1024, %s44, [#allocation6], 64, 64, 4
    $region13: #{tpu_custom_call.1} parent=1 // pred_fallthru
      _
    // Predicated region
    $region14: #{tpu_custom_call.1} parent=1 // pred_check
      _
    $region15: #{tpu_custom_call.1} parent=1 // pred_check_branch
      %51 = sbr.rel (0) target = $region17
    $region16: #{tpu_custom_call.1} parent=1 // pred_region
      %s53 = ssub.s32 1024, 1024
      %54 = vsyncadd [#allocation9], %s53
      %s55 = sshll.u32 [#allocation8], 4
      %s56 = int_to_ptr.vmem [resolvable:$true] %s55
      %61 = dma.hbm_to_vmem [thread:$0]  %s3, 1024, %s56, [#allocation9], 64, 64, 4
    $region17: #{tpu_custom_call.1} parent=1 // pred_fallthru
      _
    // Predicated region
    $region18: #{tpu_custom_call.1} parent=1 // pred_check
      _
    $region19: #{tpu_custom_call.1} parent=1 // pred_check_branch
      %63 = sbr.rel (0) target = $region21
    $region20: #{tpu_custom_call.1} parent=1 // pred_region
      _
    $region21: #{tpu_custom_call.1} parent=1 // pred_fallthru
      _
    // Predicated region
    $region22: #{tpu_custom_call.1} parent=1 // pred_check
      _
    $region23: #{tpu_custom_call.1} parent=1 // pred_check_branch
      %65 = sbr.rel (0) target = $region25
    $region24: #{tpu_custom_call.1} parent=1 // pred_region
      %66 = dma.done [#allocation3], 128
    $region25: #{tpu_custom_call.1} parent=1 // pred_fallthru
      _
    // Predicated region
    $region26: #{tpu_custom_call.1} parent=1 // pred_check
      _
    $region27: #{tpu_custom_call.1} parent=1 // pred_check_branch
      %68 = sbr.rel (0) target = $region29
    $region28: #{tpu_custom_call.1} parent=1 // pred_region
      %69 = dma.done [#allocation6], 1024
    $region29: #{tpu_custom_call.1} parent=1 // pred_fallthru
      _
    // Predicated region
    $region30: #{tpu_custom_call.1} parent=1 // pred_check
      _
    $region31: #{tpu_custom_call.1} parent=1 // pred_check_branch
      %71 = sbr.rel (0) target = $region33
    $region32: #{tpu_custom_call.1} parent=1 // pred_region
      %72 = dma.done [#allocation6], 1024
    $region33: #{tpu_custom_call.1} parent=1 // pred_fallthru
      _
    // Predicated region
    $region34: #{tpu_custom_call.1} parent=1 // pred_check
      _
    $region35: #{tpu_custom_call.1} parent=1 // pred_check_branch
      %74 = sbr.rel (0) target = $region37
    $region36: #{tpu_custom_call.1} parent=1 // pred_region
      %75 = dma.done [#allocation9], 1024
    $region37: #{tpu_custom_call.1} parent=1 // pred_fallthru
      _
    %v77 = vld [vmem:[#allocation2] sm:$0xf]
    %v78 = vld [vmem:[#allocation2 + $0x4] sm:$0xf]
    %v79 = vld [vmem:[#allocation5] sm:$0xf]
    %v80 = vld [vmem:[#allocation5 + $0x4] sm:$0xf]
    %v81 = vld [vmem:[#allocation5 + $0x8] sm:$0xf]
    %v82 = vld [vmem:[#allocation5 + $0xc] sm:$0xf]
    %v83 = vld [vmem:[#allocation5 + $0x10] sm:$0xf]
    %v84 = vld [vmem:[#allocation5 + $0x14] sm:$0xf]
    %v85 = vld [vmem:[#allocation5 + $0x18] sm:$0xf]
    %v86 = vld [vmem:[#allocation5 + $0x1c] sm:$0xf]
    %v87 = vld [vmem:[#allocation5 + $0x20] sm:$0xf]
    %v88 = vld [vmem:[#allocation5 + $0x24] sm:$0xf]
    %v89 = vld [vmem:[#allocation5 + $0x28] sm:$0xf]
    %v90 = vld [vmem:[#allocation5 + $0x2c] sm:$0xf]
    %v91 = vld [vmem:[#allocation5 + $0x30] sm:$0xf]
    %v92 = vld [vmem:[#allocation5 + $0x34] sm:$0xf]
    %v93 = vld [vmem:[#allocation5 + $0x38] sm:$0xf]
    %v94 = vld [vmem:[#allocation5 + $0x3c] sm:$0xf]
    %v97 = vunpack.c.l.b16 %v77
    %v98 = vunpack.c.l.b16 %v78
    %v99 = vpack.c.b16 %v98, %v97
    %v117 = vunpack.c.l.b16 %v79
    %v118 = vunpack.c.l.b16 %v80
    %v119 = vunpack.c.l.b16 %v81
    %v120 = vunpack.c.l.b16 %v82
    %v121 = vunpack.c.l.b16 %v83
    %v122 = vunpack.c.l.b16 %v84
    %v123 = vunpack.c.l.b16 %v85
    %v124 = vunpack.c.l.b16 %v86
    %v125 = vunpack.c.l.b16 %v87
    %v126 = vunpack.c.l.b16 %v88
    %v127 = vunpack.c.l.b16 %v89
    %v128 = vunpack.c.l.b16 %v90
    %v129 = vunpack.c.l.b16 %v91
    %v130 = vunpack.c.l.b16 %v92
    %v131 = vunpack.c.l.b16 %v93
    %v132 = vunpack.c.l.b16 %v94
    %v133 = vpack.c.b16 %v118, %v117
    %v134 = vpack.c.b16 %v120, %v119
    %v135 = vpack.c.b16 %v122, %v121
    %v136 = vpack.c.b16 %v124, %v123
    %v137 = vpack.c.b16 %v126, %v125
    %v138 = vpack.c.b16 %v128, %v127
    %v139 = vpack.c.b16 %v130, %v129
    %v140 = vpack.c.b16 %v132, %v131
    %149 = vmatprep.subr.bf16.mxu0 0
    %150 = vmatpush1.bf16.msra.mxu0 %v133
    %151 = vmatprep.subr.bf16.mxu0 0
    %152 = vmatpush1.bf16.msra.mxu0 %v134
    %153 = vmatprep.subr.bf16.mxu0 0
    %154 = vmatpush1.bf16.msra.mxu0 %v135
    %155 = vmatprep.subr.bf16.mxu0 0
    %156 = vmatpush1.bf16.msra.mxu0 %v136
    %157 = vmatprep.subr.bf16.mxu0 0
    %158 = vmatpush1.bf16.msra.mxu0 %v137
    %159 = vmatprep.subr.bf16.mxu0 0
    %160 = vmatpush1.bf16.msra.mxu0 %v138
    %161 = vmatprep.subr.bf16.mxu0 0
    %162 = vmatpush1.bf16.msra.mxu0 %v139
    %163 = vmatprep.subr.bf16.mxu0 0
    %164 = vmatpush1.bf16.msra.mxu0 %v140
    %165 = vmatprep.subr.bf16.mxu0 0
    %166 = vmatpush1.bf16.msra.mxu0 0
    %167 = vmatprep.subr.bf16.mxu0 0
    %168 = vmatpush1.bf16.msra.mxu0 0
    %169 = vmatprep.subr.bf16.mxu0 0
    %170 = vmatpush1.bf16.msra.mxu0 0
    %171 = vmatprep.subr.bf16.mxu0 0
    %172 = vmatpush1.bf16.msra.mxu0 0
    %173 = vmatprep.subr.bf16.mxu0 0
    %174 = vmatpush1.bf16.msra.mxu0 0
    %175 = vmatprep.subr.bf16.mxu0 0
    %176 = vmatpush1.bf16.msra.mxu0 0
    %177 = vmatprep.subr.bf16.mxu0 0
    %178 = vmatpush1.bf16.msra.mxu0 0
    %179 = vmatprep.subr.bf16.mxu0 0
    %180 = vmatpush1.bf16.msra.mxu0 0
    %181 = vmatprep.mubr.bf16.mxu0 0
    %182 = vmatmul.mubr.bf16.gmra.mrb[0].mxu0 %v99
    %v183 = vpop.f32.mrb[0].mxu0
    %v184 = vadd.f32 0.0, %v183
    %v185 = vpop.f32.mrb[0].mxu0
    %v186 = vpop.f32.mrb[0].mxu0
    %v187 = vadd.f32 0.0, %v186
    %v188 = vpop.f32.mrb[0].mxu0
    %189 = vdwg.mxu0
    %v190 = vmax.f32 %v184, 0.0
    %v191 = vmax.f32 %v187, 0.0
    %v192 = vpack.c.bf16 %v191, %v190
    %v193 = vld [vmem:[#allocation7] sm:$0xf]
    %v194 = vld [vmem:[#allocation7 + $0x4] sm:$0xf]
    %v195 = vld [vmem:[#allocation7 + $0x8] sm:$0xf]
    %v196 = vld [vmem:[#allocation7 + $0xc] sm:$0xf]
    %v197 = vld [vmem:[#allocation7 + $0x10] sm:$0xf]
    %v198 = vld [vmem:[#allocation7 + $0x14] sm:$0xf]
    %v199 = vld [vmem:[#allocation7 + $0x18] sm:$0xf]
    %v200 = vld [vmem:[#allocation7 + $0x1c] sm:$0xf]
    %v201 = vld [vmem:[#allocation7 + $0x20] sm:$0xf]
    %v202 = vld [vmem:[#allocation7 + $0x24] sm:$0xf]
    %v203 = vld [vmem:[#allocation7 + $0x28] sm:$0xf]
    %v204 = vld [vmem:[#allocation7 + $0x2c] sm:$0xf]
    %v205 = vld [vmem:[#allocation7 + $0x30] sm:$0xf]
    %v206 = vld [vmem:[#allocation7 + $0x34] sm:$0xf]
    %v207 = vld [vmem:[#allocation7 + $0x38] sm:$0xf]
    %v208 = vld [vmem:[#allocation7 + $0x3c] sm:$0xf]
    %v225 = vunpack.c.l.b16 %v193
    %v226 = vunpack.c.l.b16 %v194
    %v227 = vunpack.c.l.b16 %v195
    %v228 = vunpack.c.l.b16 %v196
    %v229 = vunpack.c.l.b16 %v197
    %v230 = vunpack.c.l.b16 %v198
    %v231 = vunpack.c.l.b16 %v199
    %v232 = vunpack.c.l.b16 %v200
    %v233 = vunpack.c.l.b16 %v201
    %v234 = vunpack.c.l.b16 %v202
    %v235 = vunpack.c.l.b16 %v203
    %v236 = vunpack.c.l.b16 %v204
    %v237 = vunpack.c.l.b16 %v205
    %v238 = vunpack.c.l.b16 %v206
    %v239 = vunpack.c.l.b16 %v207
    %v240 = vunpack.c.l.b16 %v208
    %v241 = vpack.c.b16 %v226, %v225
    %v242 = vpack.c.b16 %v228, %v227
    %v243 = vpack.c.b16 %v230, %v229
    %v244 = vpack.c.b16 %v232, %v231
    %v245 = vpack.c.b16 %v234, %v233
    %v246 = vpack.c.b16 %v236, %v235
    %v247 = vpack.c.b16 %v238, %v237
    %v248 = vpack.c.b16 %v240, %v239
    %257 = vmatprep.subr.bf16.mxu0 0
    %258 = vmatpush1.bf16.msra.mxu0 %v241
    %259 = vmatprep.subr.bf16.mxu0 0
    %260 = vmatpush1.bf16.msra.mxu0 %v242
    %261 = vmatprep.subr.bf16.mxu0 0
    %262 = vmatpush1.bf16.msra.mxu0 %v243
    %263 = vmatprep.subr.bf16.mxu0 0
    %264 = vmatpush1.bf16.msra.mxu0 %v244
    %265 = vmatprep.subr.bf16.mxu0 0
    %266 = vmatpush1.bf16.msra.mxu0 %v245
    %267 = vmatprep.subr.bf16.mxu0 0
    %268 = vmatpush1.bf16.msra.mxu0 %v246
    %269 = vmatprep.subr.bf16.mxu0 0
    %270 = vmatpush1.bf16.msra.mxu0 %v247
    %271 = vmatprep.subr.bf16.mxu0 0
    %272 = vmatpush1.bf16.msra.mxu0 %v248
    %273 = vmatprep.subr.bf16.mxu0 0
    %274 = vmatpush1.bf16.msra.mxu0 0
    %275 = vmatprep.subr.bf16.mxu0 0
    %276 = vmatpush1.bf16.msra.mxu0 0
    %277 = vmatprep.subr.bf16.mxu0 0
    %278 = vmatpush1.bf16.msra.mxu0 0
    %279 = vmatprep.subr.bf16.mxu0 0
    %280 = vmatpush1.bf16.msra.mxu0 0
    %281 = vmatprep.subr.bf16.mxu0 0
    %282 = vmatpush1.bf16.msra.mxu0 0
    %283 = vmatprep.subr.bf16.mxu0 0
    %284 = vmatpush1.bf16.msra.mxu0 0
    %285 = vmatprep.subr.bf16.mxu0 0
    %286 = vmatpush1.bf16.msra.mxu0 0
    %287 = vmatprep.subr.bf16.mxu0 0
    %288 = vmatpush1.bf16.msra.mxu0 0
    %289 = vmatprep.mubr.bf16.mxu0 0
    %290 = vmatmul.mubr.bf16.gmra.mrb[0].mxu0 %v192
    %v291 = vpop.f32.mrb[0].mxu0
    %v292 = vadd.f32 0.0, %v291
    %v293 = vpop.f32.mrb[0].mxu0
    %v294 = vpop.f32.mrb[0].mxu0
    %v295 = vadd.f32 0.0, %v294
    %v296 = vpop.f32.mrb[0].mxu0
    %297 = vdwg.mxu0
    %v298 = vmax.f32 %v292, 0.0
    %v299 = vmax.f32 %v295, 0.0
    %v300 = vpack.c.bf16 %v299, %v298
    %v301 = vld [vmem:[#allocation8] sm:$0xf]
    %v302 = vld [vmem:[#allocation8 + $0x4] sm:$0xf]
    %v303 = vld [vmem:[#allocation8 + $0x8] sm:$0xf]
    %v304 = vld [vmem:[#allocation8 + $0xc] sm:$0xf]
    %v305 = vld [vmem:[#allocation8 + $0x10] sm:$0xf]
    %v306 = vld [vmem:[#allocation8 + $0x14] sm:$0xf]
    %v307 = vld [vmem:[#allocation8 + $0x18] sm:$0xf]
    %v308 = vld [vmem:[#allocation8 + $0x1c] sm:$0xf]
    %v309 = vld [vmem:[#allocation8 + $0x20] sm:$0xf]
    %v310 = vld [vmem:[#allocation8 + $0x24] sm:$0xf]
    %v311 = vld [vmem:[#allocation8 + $0x28] sm:$0xf]
    %v312 = vld [vmem:[#allocation8 + $0x2c] sm:$0xf]
    %v313 = vld [vmem:[#allocation8 + $0x30] sm:$0xf]
    %v314 = vld [vmem:[#allocation8 + $0x34] sm:$0xf]
    %v315 = vld [vmem:[#allocation8 + $0x38] sm:$0xf]
    %v316 = vld [vmem:[#allocation8 + $0x3c] sm:$0xf]
    %v317 = vld [vmem:[%s4] sm:$0x1]
    %v319 = vlaneseq
    %v320 = vshrl.u32 %v319, 7
    %v321 = vsub.s32 0, %v320
    %v322 = vrot.slane %v317, %v321
    %v340 = vunpack.c.l.b16 %v301
    %v341 = vunpack.c.l.b16 %v302
    %v342 = vunpack.c.l.b16 %v303
    %v343 = vunpack.c.l.b16 %v304
    %v344 = vunpack.c.l.b16 %v305
    %v345 = vunpack.c.l.b16 %v306
    %v346 = vunpack.c.l.b16 %v307
    %v347 = vunpack.c.l.b16 %v308
    %v348 = vunpack.c.l.b16 %v309
    %v349 = vunpack.c.l.b16 %v310
    %v350 = vunpack.c.l.b16 %v311
    %v351 = vunpack.c.l.b16 %v312
    %v352 = vunpack.c.l.b16 %v313
    %v353 = vunpack.c.l.b16 %v314
    %v354 = vunpack.c.l.b16 %v315
    %v355 = vunpack.c.l.b16 %v316
    %v356 = vpack.c.b16 %v341, %v340
    %v357 = vpack.c.b16 %v343, %v342
    %v358 = vpack.c.b16 %v345, %v344
    %v359 = vpack.c.b16 %v347, %v346
    %v360 = vpack.c.b16 %v349, %v348
    %v361 = vpack.c.b16 %v351, %v350
    %v362 = vpack.c.b16 %v353, %v352
    %v363 = vpack.c.b16 %v355, %v354
    %372 = vmatprep.subr.bf16.mxu0 0
    %373 = vmatpush1.bf16.msra.mxu0 %v356
    %374 = vmatprep.subr.bf16.mxu0 0
    %375 = vmatpush1.bf16.msra.mxu0 %v357
    %376 = vmatprep.subr.bf16.mxu0 0
    %377 = vmatpush1.bf16.msra.mxu0 %v358
    %378 = vmatprep.subr.bf16.mxu0 0
    %379 = vmatpush1.bf16.msra.mxu0 %v359
    %380 = vmatprep.subr.bf16.mxu0 0
    %381 = vmatpush1.bf16.msra.mxu0 %v360
    %382 = vmatprep.subr.bf16.mxu0 0
    %383 = vmatpush1.bf16.msra.mxu0 %v361
    %384 = vmatprep.subr.bf16.mxu0 0
    %385 = vmatpush1.bf16.msra.mxu0 %v362
    %386 = vmatprep.subr.bf16.mxu0 0
    %387 = vmatpush1.bf16.msra.mxu0 %v363
    %388 = vmatprep.subr.bf16.mxu0 0
    %389 = vmatpush1.bf16.msra.mxu0 0
    %390 = vmatprep.subr.bf16.mxu0 0
    %391 = vmatpush1.bf16.msra.mxu0 0
    %392 = vmatprep.subr.bf16.mxu0 0
    %393 = vmatpush1.bf16.msra.mxu0 0
    %394 = vmatprep.subr.bf16.mxu0 0
    %395 = vmatpush1.bf16.msra.mxu0 0
    %396 = vmatprep.subr.bf16.mxu0 0
    %397 = vmatpush1.bf16.msra.mxu0 0
    %398 = vmatprep.subr.bf16.mxu0 0
    %399 = vmatpush1.bf16.msra.mxu0 0
    %400 = vmatprep.subr.bf16.mxu0 0
    %401 = vmatpush1.bf16.msra.mxu0 0
    %402 = vmatprep.subr.bf16.mxu0 0
    %403 = vmatpush1.bf16.msra.mxu0 0
    %404 = vmatprep.mubr.bf16.mxu0 0
    %405 = vmatmul.mubr.bf16.gmra.mrb[0].mxu0 %v300
    %v406 = vpop.f32.mrb[0].mxu0
    %v407 = vadd.f32 %v322, %v406
    %v408 = vpop.f32.mrb[0].mxu0
    %v409 = vpop.f32.mrb[0].mxu0
    %v410 = vadd.f32 %v322, %v409
    %v411 = vpop.f32.mrb[0].mxu0
    %412 = vdwg.mxu0
    %413 = vst [vmem:[#allocation10] sm:$0xff] %v407
    %414 = vst [vmem:[#allocation10 + $0x8] sm:$0xff] %v410
    // Predicated region
    $region38: #{tpu_custom_call.1} parent=1 // pred_check
      _
    $region39: #{tpu_custom_call.1} parent=1 // pred_check_branch
      %416 = sbr.rel (0) target = $region41
    $region40: #{tpu_custom_call.1} parent=1 // pred_region
      %s418 = ssub.s32 256, 256
      %419 = vsyncadd [#allocation4], %s418
      %s420 = sshll.u32 [#allocation10], 4
      %s421 = int_to_ptr.vmem [resolvable:$true] %s420
      %426 = dma.vmem_to_hbm [thread:$0]  %s421, 256, %s5, [#allocation4], 128, 128, 8
    $region41: #{tpu_custom_call.1} parent=1 // pred_fallthru
      _
    // Predicated region
    $region42: #{tpu_custom_call.1} parent=1 // pred_check
      _
    $region43: #{tpu_custom_call.1} parent=1 // pred_check_branch
      %428 = sbr.rel (0) target = $region45
    $region44: #{tpu_custom_call.1} parent=1 // pred_region
      %429 = dma.done [#allocation4], 256
    $region45: #{tpu_custom_call.1} parent=1 // pred_fallthru
      _
    %430 = vsyncpa [#allocation3], 1
    %431 = vsyncpa [#allocation6], 1
    %432 = vsyncpa [#allocation9], 1
    %433 = vsyncpa [#allocation4], 1

</llo_original>
